<compile_context>
chip_gen: v6e
topology: v6e:2x2x1
jax: 0.10.0
libtpu: 0.0.40
codegen_flags: <defaults>
</compile_context>

<pallas_src>
import functools

import jax
import jax.numpy as jnp
from jax import lax
from jax.experimental import pallas as pl
from jax.experimental.pallas import tpu as pltpu

PACK = 4  # 4 tokens * 32 features = 128 lanes


def _round_up(x, m):
    return ((x + m - 1) // m) * m


def _make_pwff_kernel(tile_m, sub_m):
    """Kernel over a (tile_m, 128) packed-token tile; weights are VMEM-resident."""
    assert tile_m % sub_m == 0
    n_sub = tile_m // sub_m

    def kernel(x_ref, w1_ref, b1_ref, w2_ref, b2_ref, o_ref):
        w1 = w1_ref[...]          # (128, 128) bf16, resident
        b1 = b1_ref[...]          # (1, 128)   f32
        w2 = w2_ref[...]          # (128, 128) bf16, resident
        b2 = b2_ref[...]          # (1, 128)   f32

        def ff(x):
            xb = x.astype(jnp.bfloat16)                              # MXU-native
            h = jnp.dot(xb, w1, preferred_element_type=jnp.float32) + b1
            h = jnp.maximum(h, 0.0)                                  # ReLU in f32 (VPU)
            y = jnp.dot(h.astype(jnp.bfloat16), w2,
                        preferred_element_type=jnp.float32) + b2
            return y

        if n_sub == 1:
            o_ref[...] = ff(x_ref[...]).astype(o_ref.dtype)
        else:
            # Sub-block so per-chunk intermediates stay in vregs (no spills).
            def sub_block(s, carry):
                r = pl.multiple_of(s * sub_m, sub_m)
                x = x_ref[pl.ds(r, sub_m), :]
                o_ref[pl.ds(r, sub_m), :] = ff(x).astype(o_ref.dtype)
                return carry

            lax.fori_loop(0, n_sub, sub_block, 0, unroll=min(n_sub, 4))

    return kernel


def pack_params(w1, b1, w2, b2, pack=PACK):
    """One-time (hoisted) packing of nn.Linear weights into lane-dense form.

    w1, w2: (ff, d_model) as stored by nn.Linear; b1, b2: (ff,).
    Returns 128x128 block-diagonal bf16 W^T matrices and (1, 128) f32 biases.
    """
    ff, d_model = w1.shape
    assert w2.shape == (ff, d_model) and ff == d_model, (
        "reference module requires ff_dimensions == tensor_dimensions")
    eye = jnp.eye(pack, dtype=jnp.float32)
    w1_bd = jnp.kron(eye, jnp.asarray(w1, jnp.float32).T).astype(jnp.bfloat16)
    w2_bd = jnp.kron(eye, jnp.asarray(w2, jnp.float32).T).astype(jnp.bfloat16)
    b1_p = jnp.tile(jnp.asarray(b1, jnp.float32), pack).reshape(1, pack * ff)
    b2_p = jnp.tile(jnp.asarray(b2, jnp.float32), pack).reshape(1, pack * ff)
    return w1_bd, b1_p, w2_bd, b2_p


@functools.partial(jax.jit, static_argnames=("tile_m", "sub_m"))
def position_wise_ff(x, w1_bd, b1_p, w2_bd, b2_p, *, tile_m=4096, sub_m=256):
    """x: (batch, seq, d_model); packed params from pack_params().

    Output dtype == x.dtype (stream bf16 activations for the full bandwidth win).
    """
    batch, seq, d_model = x.shape
    packed_width = w1_bd.shape[0]              # pack * d_model (= 128)
    pack = packed_width // d_model
    packed_ff = b1_p.shape[1]                  # pack * ff (= 128)
    ff = packed_ff // pack

    # --- lane-pack tokens: (m, d_model) -> (mp, 128). Pure metadata reshape;
    # a pad is only needed when m is not a multiple of `pack`.
    m = batch * seq
    mp = pl.cdiv(m, pack)
    x2d = x.reshape(m, d_model)
    if mp * pack != m:
        x2d = jnp.pad(x2d, ((0, mp * pack - m), (0, 0)))
    xp = x2d.reshape(mp, packed_width)

    # --- tiling: no wrapper-side tile padding; Pallas masks the ragged edge
    # block.  Mid-size inputs get >=2 "parallel" steps (v7x has 2 TCs).
    if mp > tile_m:
        tile = tile_m
    elif mp >= 1024:
        tile = _round_up(pl.cdiv(mp, 2), sub_m)    # 2 grid steps, multiple of sub_m
    else:
        tile = mp                                  # single block, no pipeline overhead
    sub = sub_m if (tile > sub_m and tile % sub_m == 0) else tile
    grid = (pl.cdiv(mp, tile),)

    outp = pl.pallas_call(
        _make_pwff_kernel(tile, sub),
        out_shape=jax.ShapeDtypeStruct((mp, packed_ff), x.dtype),
        grid_spec=pltpu.PrefetchScalarGridSpec(
            num_scalar_prefetch=0,
            grid=grid,
            in_specs=[
                pl.BlockSpec((tile, packed_width), lambda i: (i, 0)),       # x tile
                pl.BlockSpec((packed_width, packed_ff), lambda i: (0, 0)),  # W1 (resident)
                pl.BlockSpec((1, packed_ff), lambda i: (0, 0)),             # b1
                pl.BlockSpec((packed_ff, packed_ff), lambda i: (0, 0)),     # W2 (resident)
                pl.BlockSpec((1, packed_ff), lambda i: (0, 0)),             # b2
            ],
            out_specs=pl.BlockSpec((tile, packed_ff), lambda i: (i, 0)),
        ),
        compiler_params=pltpu.CompilerParams(
            dimension_semantics=("parallel",)),
    )(xp, w1_bd, b1_p, w2_bd, b2_p)

    out2d = outp.reshape(mp * pack, ff)
    if mp * pack != m:
        out2d = out2d[:m]
    return out2d.reshape(batch, seq, ff)


def _linear_init(key, out_features, in_features, dtype=jnp.float32):
    """Deterministic nn.Linear-style init: U(-1/sqrt(in), 1/sqrt(in))."""
    kw, kb = jax.random.split(key)
    bound = 1.0 / (in_features ** 0.5)
    w = jax.random.uniform(kw, (out_features, in_features), dtype, -bound, bound)
    b = jax.random.uniform(kb, (out_features,), dtype, -bound, bound)
    return w, b


def _ref(x, w1, b1, w2, b2):
    """Reference matching kernel numerics: bf16 matmul operands, f32 accum,
    bias/ReLU in f32 — same math as lt2(relu(lt1(x)))."""
    xb = x.astype(jnp.bfloat16)
    w1b, w2b = w1.astype(jnp.bfloat16), w2.astype(jnp.bfloat16)
    h = jnp.dot(xb, w1b.T, preferred_element_type=jnp.float32) + b1
    h = jnp.maximum(h, 0.0)
    return jnp.dot(h.astype(jnp.bfloat16), w2b.T,
                   preferred_element_type=jnp.float32) + b2


if __name__ == "__main__":
    tensor_dimensions = 32
    ff_dimensions = 32           # must equal tensor_dimensions (module constraint)

    key = jax.random.PRNGKey(0)
    k_x, k_l1, k_l2, k_x2, k_x3 = jax.random.split(key, 5)

    w1, b1 = _linear_init(k_l1, ff_dimensions, tensor_dimensions)
    w2, b2 = _linear_init(k_l2, ff_dimensions, tensor_dimensions)
    packed = pack_params(w1, b1, w2, b2)   # hoisted one-time weight packing

    # Small case: single-block path (grid=(1,)), f32 I/O.
    x = jax.random.normal(k_x, (2, 8, tensor_dimensions), jnp.float32)
    out = jax.block_until_ready(position_wise_ff(x, *packed))
    assert out.shape == (2, 8, ff_dimensions)
    assert jnp.allclose(out, _ref(x, w1, b1, w2, b2), atol=2e-3, rtol=2e-3)

    # Medium case: >=2 "parallel" grid steps (v7x 2-TC split) + ragged edge block.
    x2 = jax.random.normal(k_x2, (4, 1100, tensor_dimensions), jnp.float32)
    out2 = jax.block_until_ready(position_wise_ff(x2, *packed))
    assert out2.shape == (4, 1100, ff_dimensions)
    assert jnp.allclose(out2, _ref(x2, w1, b1, w2, b2), atol=2e-3, rtol=2e-3)

    # bf16 activation streaming (halved HBM bytes in/out) + odd token count
    # exercising the pack-pad / unpack-slice path.
    x3 = jax.random.normal(k_x3, (2, 7, tensor_dimensions), jnp.float32)
    x3 = x3.astype(jnp.bfloat16)
    out3 = jax.block_until_ready(position_wise_ff(x3, *packed))
    assert out3.shape == (2, 7, ff_dimensions)
    assert out3.dtype == jnp.bfloat16
    assert jnp.allclose(out3.astype(jnp.float32),
                        _ref(x3.astype(jnp.float32), w1, b1, w2, b2),
                        atol=6e-2, rtol=6e-2)

    print("KERNEL_OK")
</pallas_src>

<mosaic_0001>
module attributes {stable_mosaic.version = 11 : i64} {
  func.func @kernel(%arg0: i32, %arg1: memref<4x128xf32, #tpu.memory_space<vmem>>, %arg2: memref<128x128xbf16, #tpu.memory_space<vmem>>, %arg3: memref<1x128xf32, #tpu.memory_space<vmem>>, %arg4: memref<128x128xbf16, #tpu.memory_space<vmem>>, %arg5: memref<1x128xf32, #tpu.memory_space<vmem>>, %arg6: memref<4x128xf32, #tpu.memory_space<vmem>>) attributes {dimension_semantics = [#tpu.dimension_semantics<parallel>], iteration_bounds = array<i64: 1>, scalar_prefetch = 0 : i64, scratch_operands = 0 : i64, tpu.core_type = #tpu.core_type<tc>, window_params = [{transform_indices = @transform_0, window_bounds = array<i64: 4, 128>}, {pipeline_mode = #tpu.pipeline_mode<synchronous>, transform_indices = @transform_1, window_bounds = array<i64: 128, 128>}, {pipeline_mode = #tpu.pipeline_mode<synchronous>, transform_indices = @transform_2, window_bounds = array<i64: 1, 128>}, {pipeline_mode = #tpu.pipeline_mode<synchronous>, transform_indices = @transform_3, window_bounds = array<i64: 128, 128>}, {pipeline_mode = #tpu.pipeline_mode<synchronous>, transform_indices = @transform_4, window_bounds = array<i64: 1, 128>}, {transform_indices = @transform_5, window_bounds = array<i64: 4, 128>}]} {
    %c0 = arith.constant 0 : index
    %c0_0 = arith.constant 0 : index
    %0 = vector.load %arg2[%c0, %c0_0] : memref<128x128xbf16, #tpu.memory_space<vmem>>, vector<128x128xbf16>
    %c0_1 = arith.constant 0 : index
    %c0_2 = arith.constant 0 : index
    %1 = vector.load %arg3[%c0_1, %c0_2] : memref<1x128xf32, #tpu.memory_space<vmem>>, vector<1x128xf32>
    %c0_3 = arith.constant 0 : index
    %c0_4 = arith.constant 0 : index
    %2 = vector.load %arg4[%c0_3, %c0_4] : memref<128x128xbf16, #tpu.memory_space<vmem>>, vector<128x128xbf16>
    %c0_5 = arith.constant 0 : index
    %c0_6 = arith.constant 0 : index
    %3 = vector.load %arg5[%c0_5, %c0_6] : memref<1x128xf32, #tpu.memory_space<vmem>>, vector<1x128xf32>
    %c0_7 = arith.constant 0 : index
    %c0_8 = arith.constant 0 : index
    %4 = vector.load %arg1[%c0_7, %c0_8] : memref<4x128xf32, #tpu.memory_space<vmem>>, vector<4x128xf32>
    %5 = arith.truncf %4 : vector<4x128xf32> to vector<4x128xbf16>
    %cst = arith.constant dense<0.000000e+00> : vector<4x128xf32>
    %6 = tpu.matmul %5, %0, %cst {dimension_numbers = #tpu.dot_dimension_numbers<[1], [0], [0], [1], [0, 0, 1, 1], [], []>} : vector<4x128xbf16>, vector<128x128xbf16>, vector<4x128xf32> -> vector<4x128xf32>
    %7 = vector.broadcast %1 : vector<1x128xf32> to vector<4x128xf32>
    %8 = arith.addf %6, %7 : vector<4x128xf32>
    %cst_9 = arith.constant 0.000000e+00 : f32
    %9 = vector.broadcast %cst_9 : f32 to vector<4x128xf32>
    %10 = arith.maximumf %8, %9 : vector<4x128xf32>
    %11 = arith.truncf %10 : vector<4x128xf32> to vector<4x128xbf16>
    %cst_10 = arith.constant dense<0.000000e+00> : vector<4x128xf32>
    %12 = tpu.matmul %11, %2, %cst_10 {dimension_numbers = #tpu.dot_dimension_numbers<[1], [0], [0], [1], [0, 0, 1, 1], [], []>} : vector<4x128xbf16>, vector<128x128xbf16>, vector<4x128xf32> -> vector<4x128xf32>
    %13 = vector.broadcast %3 : vector<1x128xf32> to vector<4x128xf32>
    %14 = arith.addf %12, %13 : vector<4x128xf32>
    %c0_11 = arith.constant 0 : index
    %c0_12 = arith.constant 0 : index
    %15 = vector.load %arg6[%c0_11, %c0_12] : memref<4x128xf32, #tpu.memory_space<vmem>>, vector<4x128xf32>
    tpu.vector_store %arg6[%c0_11, %c0_12], %14 {strides = array<i32>} : memref<4x128xf32, #tpu.memory_space<vmem>>, vector<4x128xf32>,
    return
  }
  func.func @transform_0(%arg0: i32) -> (i32, i32) {
    %c0_i32 = arith.constant 0 : i32
    %c0_i32_0 = arith.constant 0 : i32
    return %arg0, %c0_i32 : i32, i32
  }
  func.func @transform_1(%arg0: i32) -> (i32, i32) {
    %c0_i32 = arith.constant 0 : i32
    %c0_i32_0 = arith.constant 0 : i32
    %c0_i32_1 = arith.constant 0 : i32
    return %c0_i32, %c0_i32_0 : i32, i32
  }
  func.func @transform_2(%arg0: i32) -> (i32, i32) {
    %c0_i32 = arith.constant 0 : i32
    %c0_i32_0 = arith.constant 0 : i32
    %c0_i32_1 = arith.constant 0 : i32
    return %c0_i32, %c0_i32_0 : i32, i32
  }
  func.func @transform_3(%arg0: i32) -> (i32, i32) {
    %c0_i32 = arith.constant 0 : i32
    %c0_i32_0 = arith.constant 0 : i32
    %c0_i32_1 = arith.constant 0 : i32
    return %c0_i32, %c0_i32_0 : i32, i32
  }
  func.func @transform_4(%arg0: i32) -> (i32, i32) {
    %c0_i32 = arith.constant 0 : i32
    %c0_i32_0 = arith.constant 0 : i32
    %c0_i32_1 = arith.constant 0 : i32
    return %c0_i32, %c0_i32_0 : i32, i32
  }
  func.func @transform_5(%arg0: i32) -> (i32, i32) {
    %c0_i32 = arith.constant 0 : i32
    %c0_i32_0 = arith.constant 0 : i32
    return %arg0, %c0_i32 : i32, i32
  }
}

</mosaic_0001>

<llo_original>
// kernel: position_wise_ff.1
$region0: #{position_wise_ff.1}
  #allocation0 [shape = 'u32[]', space=smem, size = 0x4, offset = 0x4, fixed_abs, tag = 'smem constant byte address 0x4 - core index']
  #allocation1 [shape = 'u32[144,128]{1,0:T(1,128)}', space=vmem, size = 0x12000, scoped, tag = 'internal scratch']
  %s0 = inlined_call_operand.vmem [shape: f32[4,128], index: 0, kind: input, shape index: {}]
  %s1 = inlined_call_operand.hbm [shape: bf16[128,128], index: 1, kind: input, shape index: {}]
  %s2 = inlined_call_operand.vmem [shape: f32[1,128], index: 2, kind: input, shape index: {}]
  %s3 = inlined_call_operand.hbm [shape: bf16[128,128], index: 3, kind: input, shape index: {}]
  %s4 = inlined_call_operand.vmem [shape: f32[1,128], index: 4, kind: input, shape index: {}]
  %s5 = inlined_call_operand.vmem [shape: f32[4,128], index: 5, kind: output, shape index: {}]
  %s6 = sld [smem:[#allocation0]]
  $region38: #{position_wise_ff.1} parent=0
    _
  %s8 = ssub.s32 1, %s6
  %s9 = scalar_select 0, %s8, %s6
  $region1: #{position_wise_ff.1} parent=0
    #allocation2 [shape = 'u8[32768]{0}', space=vmem, size = 0x8000, scoped, tag = 'input window, operand 1, single buffered']
    #allocation3 [shape = 's32[1]{0}', space=sflag, size = 0x4, scoped, tag = 'scoped memory for position_wise_ff.1']
    #allocation4 [shape = 'u8[32768]{0}', space=vmem, size = 0x8000, scoped, tag = 'input window, operand 3, single buffered']
    #allocation5 [shape = 's32[1]{0}', space=sflag, size = 0x4, scoped, tag = 'scoped memory for position_wise_ff.1']
    %10 = vsyncpa [#allocation3], 0
    %11 = vsyncpa [#allocation5], 0
    // Predicated region
    $region2: #{position_wise_ff.1} parent=1 // pred_check
      _
    $region3: #{position_wise_ff.1} parent=1 // pred_check_branch
      %13 = sbr.rel (0) target = $region5
    $region4: #{position_wise_ff.1} parent=1 // pred_region
      _
    $region5: #{position_wise_ff.1} parent=1 // pred_fallthru
      _
    // Predicated region
    $region6: #{position_wise_ff.1} parent=1 // pred_check
      _
    $region7: #{position_wise_ff.1} parent=1 // pred_check_branch
      %15 = sbr.rel (0) target = $region9
    $region8: #{position_wise_ff.1} parent=1 // pred_region
      %s17 = ssub.s32 1024, 1024
      %18 = vsyncadd [#allocation3], %s17
      %s19 = sshll.u32 [#allocation2], 4
      %s20 = int_to_ptr.vmem [resolvable:$true] %s19
      %25 = dma.hbm_to_vmem [thread:$0]  %s1, 1024, %s20, [#allocation3], 64, 64, 4
    $region9: #{position_wise_ff.1} parent=1 // pred_fallthru
      _
    // Predicated region
    $region10: #{position_wise_ff.1} parent=1 // pred_check
      _
    $region11: #{position_wise_ff.1} parent=1 // pred_check_branch
      %27 = sbr.rel (0) target = $region13
    $region12: #{position_wise_ff.1} parent=1 // pred_region
      _
    $region13: #{position_wise_ff.1} parent=1 // pred_fallthru
      _
    // Predicated region
    $region14: #{position_wise_ff.1} parent=1 // pred_check
      _
    $region15: #{position_wise_ff.1} parent=1 // pred_check_branch
      %29 = sbr.rel (0) target = $region17
    $region16: #{position_wise_ff.1} parent=1 // pred_region
      %s31 = ssub.s32 1024, 1024
      %32 = vsyncadd [#allocation5], %s31
      %s33 = sshll.u32 [#allocation4], 4
      %s34 = int_to_ptr.vmem [resolvable:$true] %s33
      %39 = dma.hbm_to_vmem [thread:$0]  %s3, 1024, %s34, [#allocation5], 64, 64, 4
    $region17: #{position_wise_ff.1} parent=1 // pred_fallthru
      _
    // Predicated region
    $region18: #{position_wise_ff.1} parent=1 // pred_check
      _
    $region19: #{position_wise_ff.1} parent=1 // pred_check_branch
      %41 = sbr.rel (0) target = $region21
    $region20: #{position_wise_ff.1} parent=1 // pred_region
      _
    $region21: #{position_wise_ff.1} parent=1 // pred_fallthru
      _
    // Predicated region
    $region22: #{position_wise_ff.1} parent=1 // pred_check
      _
    $region23: #{position_wise_ff.1} parent=1 // pred_check_branch
      %43 = sbr.rel (0) target = $region25
    $region24: #{position_wise_ff.1} parent=1 // pred_region
      %44 = dma.done [#allocation3], 1024
    $region25: #{position_wise_ff.1} parent=1 // pred_fallthru
      _
    // Predicated region
    $region26: #{position_wise_ff.1} parent=1 // pred_check
      _
    $region27: #{position_wise_ff.1} parent=1 // pred_check_branch
      %46 = sbr.rel (0) target = $region29
    $region28: #{position_wise_ff.1} parent=1 // pred_region
      %47 = dma.done [#allocation5], 1024
    $region29: #{position_wise_ff.1} parent=1 // pred_fallthru
      _
    %v49 = vld [vmem:[#allocation2] sm:$0xf]
    %v50 = vld [vmem:[#allocation2 + $0x4] sm:$0xf]
    %v51 = vld [vmem:[#allocation2 + $0x8] sm:$0xf]
    %v52 = vld [vmem:[#allocation2 + $0xc] sm:$0xf]
    %v53 = vld [vmem:[#allocation2 + $0x10] sm:$0xf]
    %v54 = vld [vmem:[#allocation2 + $0x14] sm:$0xf]
    %v55 = vld [vmem:[#allocation2 + $0x18] sm:$0xf]
    %v56 = vld [vmem:[#allocation2 + $0x1c] sm:$0xf]
    %v57 = vld [vmem:[#allocation2 + $0x20] sm:$0xf]
    %v58 = vld [vmem:[#allocation2 + $0x24] sm:$0xf]
    %v59 = vld [vmem:[#allocation2 + $0x28] sm:$0xf]
    %v60 = vld [vmem:[#allocation2 + $0x2c] sm:$0xf]
    %v61 = vld [vmem:[#allocation2 + $0x30] sm:$0xf]
    %v62 = vld [vmem:[#allocation2 + $0x34] sm:$0xf]
    %v63 = vld [vmem:[#allocation2 + $0x38] sm:$0xf]
    %v64 = vld [vmem:[#allocation2 + $0x3c] sm:$0xf]
    %v65 = vld [vmem:[%s2] sm:$0x1]
    %v66 = vld [vmem:[#allocation4] sm:$0xf]
    %v67 = vld [vmem:[#allocation4 + $0x4] sm:$0xf]
    %v68 = vld [vmem:[#allocation4 + $0x8] sm:$0xf]
    %v69 = vld [vmem:[#allocation4 + $0xc] sm:$0xf]
    %v70 = vld [vmem:[#allocation4 + $0x10] sm:$0xf]
    %v71 = vld [vmem:[#allocation4 + $0x14] sm:$0xf]
    %v72 = vld [vmem:[#allocation4 + $0x18] sm:$0xf]
    %v73 = vld [vmem:[#allocation4 + $0x1c] sm:$0xf]
    %v74 = vld [vmem:[#allocation4 + $0x20] sm:$0xf]
    %v75 = vld [vmem:[#allocation4 + $0x24] sm:$0xf]
    %v76 = vld [vmem:[#allocation4 + $0x28] sm:$0xf]
    %v77 = vld [vmem:[#allocation4 + $0x2c] sm:$0xf]
    %v78 = vld [vmem:[#allocation4 + $0x30] sm:$0xf]
    %v79 = vld [vmem:[#allocation4 + $0x34] sm:$0xf]
    %v80 = vld [vmem:[#allocation4 + $0x38] sm:$0xf]
    %v81 = vld [vmem:[#allocation4 + $0x3c] sm:$0xf]
    %v82 = vld [vmem:[%s4] sm:$0x1]
    %v83 = vld [vmem:[%s0] sm:$0xf]
    %v84 = vpack.c.bf16 %v83, %v83
    %v86 = vlaneseq
    %v87 = vshrl.u32 %v86, 7
    %v88 = vsub.s32 0, %v87
    %v89 = vrot.slane %v65, %v88
    %v107 = vunpack.c.l.b16 %v49
    %v108 = vunpack.c.l.b16 %v50
    %v109 = vunpack.c.l.b16 %v51
    %v110 = vunpack.c.l.b16 %v52
    %v111 = vunpack.c.l.b16 %v53
    %v112 = vunpack.c.l.b16 %v54
    %v113 = vunpack.c.l.b16 %v55
    %v114 = vunpack.c.l.b16 %v56
    %v115 = vunpack.c.l.b16 %v57
    %v116 = vunpack.c.l.b16 %v58
    %v117 = vunpack.c.l.b16 %v59
    %v118 = vunpack.c.l.b16 %v60
    %v119 = vunpack.c.l.b16 %v61
    %v120 = vunpack.c.l.b16 %v62
    %v121 = vunpack.c.l.b16 %v63
    %v122 = vunpack.c.l.b16 %v64
    %v123 = vpack.c.b16 %v108, %v107
    %v124 = vpack.c.b16 %v110, %v109
    %v125 = vpack.c.b16 %v112, %v111
    %v126 = vpack.c.b16 %v114, %v113
    %v127 = vpack.c.b16 %v116, %v115
    %v128 = vpack.c.b16 %v118, %v117
    %v129 = vpack.c.b16 %v120, %v119
    %v130 = vpack.c.b16 %v122, %v121
    %139 = vmatprep.subr.bf16.mxu0 0
    %140 = vmatpush1.bf16.msra.mxu0 %v130
    %141 = vmatprep.subr.bf16.mxu0 0
    %142 = vmatpush1.bf16.msra.mxu0 %v129
    %143 = vmatprep.subr.bf16.mxu0 0
    %144 = vmatpush1.bf16.msra.mxu0 %v128
    %145 = vmatprep.subr.bf16.mxu0 0
    %146 = vmatpush1.bf16.msra.mxu0 %v127
    %147 = vmatprep.subr.bf16.mxu0 0
    %148 = vmatpush1.bf16.msra.mxu0 %v126
    %149 = vmatprep.subr.bf16.mxu0 0
    %150 = vmatpush1.bf16.msra.mxu0 %v125
    %151 = vmatprep.subr.bf16.mxu0 0
    %152 = vmatpush1.bf16.msra.mxu0 %v124
    %153 = vmatprep.subr.bf16.mxu0 0
    %154 = vmatpush1.bf16.msra.mxu0 %v123
    %155 = vmatprep.subr.bf16.mxu0 0
    %156 = vmatpush2.bf16.msra.mxu0 0
    %157 = vmatprep.subr.bf16.mxu0 0
    %158 = vmatpush2.bf16.msra.mxu0 0
    %159 = vmatprep.subr.bf16.mxu0 0
    %160 = vmatpush2.bf16.msra.mxu0 0
    %161 = vmatprep.subr.bf16.mxu0 0
    %162 = vmatpush2.bf16.msra.mxu0 0
    %163 = vmatprep.subr.bf16.mxu0 0
    %164 = vmatpush2.bf16.msra.mxu0 0
    %165 = vmatprep.subr.bf16.mxu0 0
    %166 = vmatpush2.bf16.msra.mxu0 0
    %167 = vmatprep.subr.bf16.mxu0 0
    %168 = vmatpush2.bf16.msra.mxu0 0
    %169 = vmatprep.subr.bf16.mxu0 0
    %170 = vmatpush2.bf16.msra.mxu0 0
    %171 = vmatprep.mubr.bf16.mxu0 0
    %172 = vmatmul.mubr.bf16.gmra.mxu0 %v84
    %v173 = vpop.f32.mrf.mxu0
    %v174 = vadd.f32 %v89, %v173
    %v175 = vpop.f32.mrf.mxu0
    %v176 = vpop.f32.mrf.mxu0
    %v177 = vpop.f32.mrf.mxu0
    %178 = vdwg.mxu0
    %v179 = vmax.f32 %v174, 0.0
    %v180 = vpack.c.bf16 %v179, %v179
    %v182 = vlaneseq
    %v183 = vshrl.u32 %v182, 7
    %v184 = vsub.s32 0, %v183
    %v185 = vrot.slane %v82, %v184
    %v203 = vunpack.c.l.b16 %v66
    %v204 = vunpack.c.l.b16 %v67
    %v205 = vunpack.c.l.b16 %v68
    %v206 = vunpack.c.l.b16 %v69
    %v207 = vunpack.c.l.b16 %v70
    %v208 = vunpack.c.l.b16 %v71
    %v209 = vunpack.c.l.b16 %v72
    %v210 = vunpack.c.l.b16 %v73
    %v211 = vunpack.c.l.b16 %v74
    %v212 = vunpack.c.l.b16 %v75
    %v213 = vunpack.c.l.b16 %v76
    %v214 = vunpack.c.l.b16 %v77
    %v215 = vunpack.c.l.b16 %v78
    %v216 = vunpack.c.l.b16 %v79
    %v217 = vunpack.c.l.b16 %v80
    %v218 = vunpack.c.l.b16 %v81
    %v219 = vpack.c.b16 %v204, %v203
    %v220 = vpack.c.b16 %v206, %v205
    %v221 = vpack.c.b16 %v208, %v207
    %v222 = vpack.c.b16 %v210, %v209
    %v223 = vpack.c.b16 %v212, %v211
    %v224 = vpack.c.b16 %v214, %v213
    %v225 = vpack.c.b16 %v216, %v215
    %v226 = vpack.c.b16 %v218, %v217
    %235 = vmatprep.subr.bf16.mxu0 0
    %236 = vmatpush1.bf16.msra.mxu0 %v226
    %237 = vmatprep.subr.bf16.mxu0 0
    %238 = vmatpush1.bf16.msra.mxu0 %v225
    %239 = vmatprep.subr.bf16.mxu0 0
    %240 = vmatpush1.bf16.msra.mxu0 %v224
    %241 = vmatprep.subr.bf16.mxu0 0
    %242 = vmatpush1.bf16.msra.mxu0 %v223
    %243 = vmatprep.subr.bf16.mxu0 0
    %244 = vmatpush1.bf16.msra.mxu0 %v222
    %245 = vmatprep.subr.bf16.mxu0 0
    %246 = vmatpush1.bf16.msra.mxu0 %v221
    %247 = vmatprep.subr.bf16.mxu0 0
    %248 = vmatpush1.bf16.msra.mxu0 %v220
    %249 = vmatprep.subr.bf16.mxu0 0
    %250 = vmatpush1.bf16.msra.mxu0 %v219
    %251 = vmatprep.subr.bf16.mxu0 0
    %252 = vmatpush2.bf16.msra.mxu0 0
    %253 = vmatprep.subr.bf16.mxu0 0
    %254 = vmatpush2.bf16.msra.mxu0 0
    %255 = vmatprep.subr.bf16.mxu0 0
    %256 = vmatpush2.bf16.msra.mxu0 0
    %257 = vmatprep.subr.bf16.mxu0 0
    %258 = vmatpush2.bf16.msra.mxu0 0
    %259 = vmatprep.subr.bf16.mxu0 0
    %260 = vmatpush2.bf16.msra.mxu0 0
    %261 = vmatprep.subr.bf16.mxu0 0
    %262 = vmatpush2.bf16.msra.mxu0 0
    %263 = vmatprep.subr.bf16.mxu0 0
    %264 = vmatpush2.bf16.msra.mxu0 0
    %265 = vmatprep.subr.bf16.mxu0 0
    %266 = vmatpush2.bf16.msra.mxu0 0
    %267 = vmatprep.mubr.bf16.mxu0 0
    %268 = vmatmul.mubr.bf16.gmra.mxu0 %v180
    %v269 = vpop.f32.mrf.mxu0
    %v270 = vadd.f32 %v185, %v269
    %v271 = vpop.f32.mrf.mxu0
    %v272 = vpop.f32.mrf.mxu0
    %v273 = vpop.f32.mrf.mxu0
    %274 = vdwg.mxu0
    %275 = vst [vmem:[%s5] sm:$0xf] %v270
    // Predicated region
    $region30: #{position_wise_ff.1} parent=1 // pred_check
      _
    $region31: #{position_wise_ff.1} parent=1 // pred_check_branch
      %277 = sbr.rel (0) target = $region33
    $region32: #{position_wise_ff.1} parent=1 // pred_region
      _
    $region33: #{position_wise_ff.1} parent=1 // pred_fallthru
      _
    // Predicated region
    $region34: #{position_wise_ff.1} parent=1 // pred_check
      _
    $region35: #{position_wise_ff.1} parent=1 // pred_check_branch
      %279 = sbr.rel (0) target = $region37
    $region36: #{position_wise_ff.1} parent=1 // pred_region
      _
    $region37: #{position_wise_ff.1} parent=1 // pred_fallthru
      _
    %280 = vsyncpa [#allocation3], 1
    %281 = vsyncpa [#allocation5], 1

</llo_original>
